<compile_context>
chip_gen: v7x
topology: tpu7x:2x2x1
jax: 0.10.0
libtpu: 0.0.40
codegen_flags: <defaults>
</compile_context>

<pallas_src>
import jax
import jax.numpy as jnp
from jax.experimental import pallas as pl
from jax.experimental.pallas import tpu as pltpu


def _round_up(n, m):
    return ((n + m - 1) // m) * m


def _pad2(a, rows, cols):
    return jnp.pad(a, ((0, rows - a.shape[0]), (0, cols - a.shape[1])))


def _pose_prober_kernel(x_ref,
                        w1_ref, b1_ref,
                        w2_ref, b2_ref,
                        w3_ref, b3_ref,
                        w4_ref, b4_ref,
                        out_ref):
    """One batch tile: 4 matmuls (bf16 operands, f32 accum) + bias + ReLU."""
    h = jnp.dot(x_ref[...], w1_ref[...],
                preferred_element_type=jnp.float32) + b1_ref[...]
    h = jnp.maximum(h, 0.0)

    h = jnp.dot(h.astype(jnp.bfloat16), w2_ref[...],
                preferred_element_type=jnp.float32) + b2_ref[...]
    h = jnp.maximum(h, 0.0)

    h = jnp.dot(h.astype(jnp.bfloat16), w3_ref[...],
                preferred_element_type=jnp.float32) + b3_ref[...]
    h = jnp.maximum(h, 0.0)

    y = jnp.dot(h.astype(jnp.bfloat16), w4_ref[...],
                preferred_element_type=jnp.float32) + b4_ref[...]
    out_ref[...] = y.astype(out_ref.dtype)


def pose_prober_forward(x, params, *, tile_b=512):
    """x: (B, input_dim) f32. params: transposed weights (in, out) + biases (1, out)."""
    B, d_in = x.shape
    h1 = params["w1"].shape[1]
    h2 = params["w2"].shape[1]
    h3 = params["w3"].shape[1]
    d_out = params["w4"].shape[1]

    # Lane-dense (multiple-of-128) padded feature dims.
    d_in_p = _round_up(d_in, 128)
    h1_p = _round_up(h1, 128)
    h2_p = _round_up(h2, 128)
    h3_p = _round_up(h3, 128)
    d_out_p = _round_up(d_out, 128)

    # Batch tiling (sublane aligned); never tile wider than the batch itself.
    tile_b = max(8, _round_up(min(tile_b, _round_up(B, 8)), 8))
    b_p = _round_up(B, tile_b)
    grid = (b_p // tile_b,)

    # Pad + cast once in the wrapper (outside the hot loop).
    x_p = _pad2(x, b_p, d_in_p).astype(jnp.bfloat16)
    w1 = _pad2(params["w1"], d_in_p, h1_p).astype(jnp.bfloat16)
    w2 = _pad2(params["w2"], h1_p, h2_p).astype(jnp.bfloat16)
    w3 = _pad2(params["w3"], h2_p, h3_p).astype(jnp.bfloat16)
    w4 = _pad2(params["w4"], h3_p, d_out_p).astype(jnp.bfloat16)
    b1 = _pad2(params["b1"], 1, h1_p).astype(jnp.float32)
    b2 = _pad2(params["b2"], 1, h2_p).astype(jnp.float32)
    b3 = _pad2(params["b3"], 1, h3_p).astype(jnp.float32)
    b4 = _pad2(params["b4"], 1, d_out_p).astype(jnp.float32)

    args = (x_p, w1, b1, w2, b2, w3, b3, w4, b4)

    tiled = lambda a: pl.BlockSpec((tile_b, a.shape[1]), lambda i: (i, 0))
    resident = lambda a: pl.BlockSpec(a.shape, lambda i: (0, 0))
    in_specs = [tiled(x_p)] + [resident(a) for a in args[1:]]
    out_spec = pl.BlockSpec((tile_b, d_out_p), lambda i: (i, 0))

    # Cost hint for the XLA scheduler.
    flops = 2 * b_p * (d_in_p * h1_p + h1_p * h2_p + h2_p * h3_p + h3_p * d_out_p)
    bytes_accessed = sum(int(a.size) * a.dtype.itemsize for a in args) \
        + b_p * d_out_p * 4
    cost = pl.CostEstimate(flops=flops, transcendentals=0,
                           bytes_accessed=bytes_accessed)

    # VMEM budget: resident weights + double-buffered x/out tiles + activations.
    weight_bytes = sum(int(a.size) * a.dtype.itemsize for a in args[1:])
    io_bytes = 2 * (tile_b * d_in_p * 2 + tile_b * d_out_p * 4)
    act_bytes = 3 * tile_b * max(h1_p, h2_p, h3_p) * 4
    vmem_limit = int(min(max(2 * (weight_bytes + io_bytes + act_bytes),
                             16 * 1024 * 1024),
                         64 * 1024 * 1024))

    out_padded = pl.pallas_call(
        _pose_prober_kernel,
        out_shape=jax.ShapeDtypeStruct((b_p, d_out_p), jnp.float32),
        grid_spec=pltpu.PrefetchScalarGridSpec(
            num_scalar_prefetch=0,
            grid=grid,
            in_specs=in_specs,
            out_specs=out_spec),
        compiler_params=pltpu.CompilerParams(
            dimension_semantics=("parallel",),
            vmem_limit_bytes=vmem_limit),
        cost_estimate=cost,
    )(*args)

    return out_padded[:B, :d_out]


def init_pose_prober_params(key, input_dim, hidden_dim=256):
    """Deterministic init matching nn.Linear shapes.

    PyTorch Linear stores weight as (out, in); we store the transpose (in, out)
    so the kernel can do x @ W without an in-kernel transpose.
    """
    dims = [(input_dim, hidden_dim),
            (hidden_dim, hidden_dim * 2),
            (hidden_dim * 2, hidden_dim),
            (hidden_dim, 6)]
    params = {}
    keys = jax.random.split(key, len(dims) * 2)
    for i, (d_in, d_out) in enumerate(dims):
        bound = 1.0 / (d_in ** 0.5)  # PyTorch Linear default init range
        w = jax.random.uniform(keys[2 * i], (d_in, d_out),
                               minval=-bound, maxval=bound, dtype=jnp.float32)
        b = jax.random.uniform(keys[2 * i + 1], (1, d_out),
                               minval=-bound, maxval=bound, dtype=jnp.float32)
        params[f"w{i+1}"] = w
        params[f"b{i+1}"] = b
    return params


def pose_prober_ref(x, params):
    """Pure-JAX f32 reference for correctness check."""
    h = jnp.maximum(x @ params["w1"] + params["b1"], 0.0)
    h = jnp.maximum(h @ params["w2"] + params["b2"], 0.0)
    h = jnp.maximum(h @ params["w3"] + params["b3"], 0.0)
    return h @ params["w4"] + params["b4"]


if __name__ == "__main__":
    key = jax.random.PRNGKey(0)
    k_x, k_p = jax.random.split(key)

    batch = 8
    input_dim = 32
    hidden_dim = 32  # small hidden size for the synthetic example

    x = jax.random.normal(k_x, (batch, input_dim), dtype=jnp.float32)
    params = init_pose_prober_params(k_p, input_dim, hidden_dim)

    out = pose_prober_forward(x, params)
    out = jax.block_until_ready(out)

    ref = pose_prober_ref(x, params)
    assert out.shape == (batch, 6), out.shape
    # bf16 MXU operands with f32 accumulation -> relaxed tolerance vs f32 ref.
    assert jnp.allclose(out, ref, atol=5e-2, rtol=5e-2), "mismatch vs reference"

    print("KERNEL_OK")
</pallas_src>

<mosaic_0001>
module attributes {stable_mosaic.version = 11 : i64} {
  func.func @_pose_prober_kernel(%arg0: i32, %arg1: memref<8x128xbf16, #tpu.memory_space<vmem>>, %arg2: memref<128x128xbf16, #tpu.memory_space<vmem>>, %arg3: memref<1x128xf32, #tpu.memory_space<vmem>>, %arg4: memref<128x128xbf16, #tpu.memory_space<vmem>>, %arg5: memref<1x128xf32, #tpu.memory_space<vmem>>, %arg6: memref<128x128xbf16, #tpu.memory_space<vmem>>, %arg7: memref<1x128xf32, #tpu.memory_space<vmem>>, %arg8: memref<128x128xbf16, #tpu.memory_space<vmem>>, %arg9: memref<1x128xf32, #tpu.memory_space<vmem>>, %arg10: memref<8x128xf32, #tpu.memory_space<vmem>>) attributes {dimension_semantics = [#tpu.dimension_semantics<parallel>], iteration_bounds = array<i64: 1>, scalar_prefetch = 0 : i64, scratch_operands = 0 : i64, tpu.core_type = #tpu.core_type<tc>, window_params = [{transform_indices = @transform_0, window_bounds = array<i64: 8, 128>}, {pipeline_mode = #tpu.pipeline_mode<synchronous>, transform_indices = @transform_1, window_bounds = array<i64: 128, 128>}, {pipeline_mode = #tpu.pipeline_mode<synchronous>, transform_indices = @transform_2, window_bounds = array<i64: 1, 128>}, {pipeline_mode = #tpu.pipeline_mode<synchronous>, transform_indices = @transform_3, window_bounds = array<i64: 128, 128>}, {pipeline_mode = #tpu.pipeline_mode<synchronous>, transform_indices = @transform_4, window_bounds = array<i64: 1, 128>}, {pipeline_mode = #tpu.pipeline_mode<synchronous>, transform_indices = @transform_5, window_bounds = array<i64: 128, 128>}, {pipeline_mode = #tpu.pipeline_mode<synchronous>, transform_indices = @transform_6, window_bounds = array<i64: 1, 128>}, {pipeline_mode = #tpu.pipeline_mode<synchronous>, transform_indices = @transform_7, window_bounds = array<i64: 128, 128>}, {pipeline_mode = #tpu.pipeline_mode<synchronous>, transform_indices = @transform_8, window_bounds = array<i64: 1, 128>}, {transform_indices = @transform_9, window_bounds = array<i64: 8, 128>}]} {
    %c0 = arith.constant 0 : index
    %c0_0 = arith.constant 0 : index
    %0 = vector.load %arg1[%c0, %c0_0] : memref<8x128xbf16, #tpu.memory_space<vmem>>, vector<8x128xbf16>
    %c0_1 = arith.constant 0 : index
    %c0_2 = arith.constant 0 : index
    %1 = vector.load %arg2[%c0_1, %c0_2] : memref<128x128xbf16, #tpu.memory_space<vmem>>, vector<128x128xbf16>
    %cst = arith.constant dense<0.000000e+00> : vector<8x128xf32>
    %2 = tpu.matmul %0, %1, %cst {dimension_numbers = #tpu.dot_dimension_numbers<[1], [0], [0], [1], [0, 0, 1, 1], [], []>} : vector<8x128xbf16>, vector<128x128xbf16>, vector<8x128xf32> -> vector<8x128xf32>
    %c0_3 = arith.constant 0 : index
    %c0_4 = arith.constant 0 : index
    %3 = vector.load %arg3[%c0_3, %c0_4] : memref<1x128xf32, #tpu.memory_space<vmem>>, vector<1x128xf32>
    %4 = vector.broadcast %3 : vector<1x128xf32> to vector<8x128xf32>
    %5 = arith.addf %2, %4 : vector<8x128xf32>
    %cst_5 = arith.constant 0.000000e+00 : f32
    %6 = vector.broadcast %cst_5 : f32 to vector<8x128xf32>
    %7 = arith.maximumf %5, %6 : vector<8x128xf32>
    %8 = arith.truncf %7 : vector<8x128xf32> to vector<8x128xbf16>
    %c0_6 = arith.constant 0 : index
    %c0_7 = arith.constant 0 : index
    %9 = vector.load %arg4[%c0_6, %c0_7] : memref<128x128xbf16, #tpu.memory_space<vmem>>, vector<128x128xbf16>
    %cst_8 = arith.constant dense<0.000000e+00> : vector<8x128xf32>
    %10 = tpu.matmul %8, %9, %cst_8 {dimension_numbers = #tpu.dot_dimension_numbers<[1], [0], [0], [1], [0, 0, 1, 1], [], []>} : vector<8x128xbf16>, vector<128x128xbf16>, vector<8x128xf32> -> vector<8x128xf32>
    %c0_9 = arith.constant 0 : index
    %c0_10 = arith.constant 0 : index
    %11 = vector.load %arg5[%c0_9, %c0_10] : memref<1x128xf32, #tpu.memory_space<vmem>>, vector<1x128xf32>
    %12 = vector.broadcast %11 : vector<1x128xf32> to vector<8x128xf32>
    %13 = arith.addf %10, %12 : vector<8x128xf32>
    %cst_11 = arith.constant 0.000000e+00 : f32
    %14 = vector.broadcast %cst_11 : f32 to vector<8x128xf32>
    %15 = arith.maximumf %13, %14 : vector<8x128xf32>
    %16 = arith.truncf %15 : vector<8x128xf32> to vector<8x128xbf16>
    %c0_12 = arith.constant 0 : index
    %c0_13 = arith.constant 0 : index
    %17 = vector.load %arg6[%c0_12, %c0_13] : memref<128x128xbf16, #tpu.memory_space<vmem>>, vector<128x128xbf16>
    %cst_14 = arith.constant dense<0.000000e+00> : vector<8x128xf32>
    %18 = tpu.matmul %16, %17, %cst_14 {dimension_numbers = #tpu.dot_dimension_numbers<[1], [0], [0], [1], [0, 0, 1, 1], [], []>} : vector<8x128xbf16>, vector<128x128xbf16>, vector<8x128xf32> -> vector<8x128xf32>
    %c0_15 = arith.constant 0 : index
    %c0_16 = arith.constant 0 : index
    %19 = vector.load %arg7[%c0_15, %c0_16] : memref<1x128xf32, #tpu.memory_space<vmem>>, vector<1x128xf32>
    %20 = vector.broadcast %19 : vector<1x128xf32> to vector<8x128xf32>
    %21 = arith.addf %18, %20 : vector<8x128xf32>
    %cst_17 = arith.constant 0.000000e+00 : f32
    %22 = vector.broadcast %cst_17 : f32 to vector<8x128xf32>
    %23 = arith.maximumf %21, %22 : vector<8x128xf32>
    %24 = arith.truncf %23 : vector<8x128xf32> to vector<8x128xbf16>
    %c0_18 = arith.constant 0 : index
    %c0_19 = arith.constant 0 : index
    %25 = vector.load %arg8[%c0_18, %c0_19] : memref<128x128xbf16, #tpu.memory_space<vmem>>, vector<128x128xbf16>
    %cst_20 = arith.constant dense<0.000000e+00> : vector<8x128xf32>
    %26 = tpu.matmul %24, %25, %cst_20 {dimension_numbers = #tpu.dot_dimension_numbers<[1], [0], [0], [1], [0, 0, 1, 1], [], []>} : vector<8x128xbf16>, vector<128x128xbf16>, vector<8x128xf32> -> vector<8x128xf32>
    %c0_21 = arith.constant 0 : index
    %c0_22 = arith.constant 0 : index
    %27 = vector.load %arg9[%c0_21, %c0_22] : memref<1x128xf32, #tpu.memory_space<vmem>>, vector<1x128xf32>
    %28 = vector.broadcast %27 : vector<1x128xf32> to vector<8x128xf32>
    %29 = arith.addf %26, %28 : vector<8x128xf32>
    %c0_23 = arith.constant 0 : index
    %c0_24 = arith.constant 0 : index
    %30 = vector.load %arg10[%c0_23, %c0_24] : memref<8x128xf32, #tpu.memory_space<vmem>>, vector<8x128xf32>
    tpu.vector_store %arg10[%c0_23, %c0_24], %29 {strides = array<i32>} : memref<8x128xf32, #tpu.memory_space<vmem>>, vector<8x128xf32>,
    return
  }
  func.func @transform_0(%arg0: i32) -> (i32, i32) {
    %c0_i32 = arith.constant 0 : i32
    %c0_i32_0 = arith.constant 0 : i32
    return %arg0, %c0_i32 : i32, i32
  }
  func.func @transform_1(%arg0: i32) -> (i32, i32) {
    %c0_i32 = arith.constant 0 : i32
    %c0_i32_0 = arith.constant 0 : i32
    %c0_i32_1 = arith.constant 0 : i32
    return %c0_i32, %c0_i32_0 : i32, i32
  }
  func.func @transform_2(%arg0: i32) -> (i32, i32) {
    %c0_i32 = arith.constant 0 : i32
    %c0_i32_0 = arith.constant 0 : i32
    %c0_i32_1 = arith.constant 0 : i32
    return %c0_i32, %c0_i32_0 : i32, i32
  }
  func.func @transform_3(%arg0: i32) -> (i32, i32) {
    %c0_i32 = arith.constant 0 : i32
    %c0_i32_0 = arith.constant 0 : i32
    %c0_i32_1 = arith.constant 0 : i32
    return %c0_i32, %c0_i32_0 : i32, i32
  }
  func.func @transform_4(%arg0: i32) -> (i32, i32) {
    %c0_i32 = arith.constant 0 : i32
    %c0_i32_0 = arith.constant 0 : i32
    %c0_i32_1 = arith.constant 0 : i32
    return %c0_i32, %c0_i32_0 : i32, i32
  }
  func.func @transform_5(%arg0: i32) -> (i32, i32) {
    %c0_i32 = arith.constant 0 : i32
    %c0_i32_0 = arith.constant 0 : i32
    %c0_i32_1 = arith.constant 0 : i32
    return %c0_i32, %c0_i32_0 : i32, i32
  }
  func.func @transform_6(%arg0: i32) -> (i32, i32) {
    %c0_i32 = arith.constant 0 : i32
    %c0_i32_0 = arith.constant 0 : i32
    %c0_i32_1 = arith.constant 0 : i32
    return %c0_i32, %c0_i32_0 : i32, i32
  }
  func.func @transform_7(%arg0: i32) -> (i32, i32) {
    %c0_i32 = arith.constant 0 : i32
    %c0_i32_0 = arith.constant 0 : i32
    %c0_i32_1 = arith.constant 0 : i32
    return %c0_i32, %c0_i32_0 : i32, i32
  }
  func.func @transform_8(%arg0: i32) -> (i32, i32) {
    %c0_i32 = arith.constant 0 : i32
    %c0_i32_0 = arith.constant 0 : i32
    %c0_i32_1 = arith.constant 0 : i32
    return %c0_i32, %c0_i32_0 : i32, i32
  }
  func.func @transform_9(%arg0: i32) -> (i32, i32) {
    %c0_i32 = arith.constant 0 : i32
    %c0_i32_0 = arith.constant 0 : i32
    return %arg0, %c0_i32 : i32, i32
  }
}

</mosaic_0001>

<llo_original>
// kernel: tpu_custom_call.1
$region0: #{tpu_custom_call.1}
  #allocation0 [shape = 'u32[]', space=smem, size = 0x4, offset = 0x4, fixed_abs, tag = 'smem constant byte address 0x4 - core index']
  #allocation1 [shape = 'u32[144,128]{1,0:T(1,128)}', space=vmem, size = 0x12000, scoped, tag = 'internal scratch']
  %s0 = inlined_call_operand.hbm [shape: bf16[8,128], index: 0, kind: input, shape index: {}]
  %s1 = inlined_call_operand.hbm [shape: bf16[128,128], index: 1, kind: input, shape index: {}]
  %s2 = inlined_call_operand.vmem [shape: f32[1,128], index: 2, kind: input, shape index: {}]
  %s3 = inlined_call_operand.hbm [shape: bf16[128,128], index: 3, kind: input, shape index: {}]
  %s4 = inlined_call_operand.vmem [shape: f32[1,128], index: 4, kind: input, shape index: {}]
  %s5 = inlined_call_operand.hbm [shape: bf16[128,128], index: 5, kind: input, shape index: {}]
  %s6 = inlined_call_operand.vmem [shape: f32[1,128], index: 6, kind: input, shape index: {}]
  %s7 = inlined_call_operand.hbm [shape: bf16[128,128], index: 7, kind: input, shape index: {}]
  %s8 = inlined_call_operand.vmem [shape: f32[1,128], index: 8, kind: input, shape index: {}]
  %s9 = inlined_call_operand.hbm [shape: f32[8,128], index: 9, kind: output, shape index: {}]
  %s10 = sld [smem:[#allocation0]]
  $region66: #{tpu_custom_call.1} parent=0
    _
  %s12 = ssub.s32 1, %s10
  %s13 = scalar_select 0, %s12, %s10
  $region1: #{tpu_custom_call.1} parent=0
    #allocation2 [shape = 'u8[2048]{0}', space=vmem, size = 0x800, scoped, tag = 'input window, operand 0, single buffered']
    #allocation3 [shape = 's32[1]{0}', space=sflag, size = 0x4, scoped, tag = 'scoped memory for tpu_custom_call.1']
    #allocation4 [shape = 's32[1]{0}', space=sflag, size = 0x4, scoped, tag = 'scoped memory for tpu_custom_call.1']
    #allocation5 [shape = 'u8[32768]{0}', space=vmem, size = 0x8000, scoped, tag = 'input window, operand 1, single buffered']
    #allocation6 [shape = 's32[1]{0}', space=sflag, size = 0x4, scoped, tag = 'scoped memory for tpu_custom_call.1']
    #allocation7 [shape = 'u8[32768]{0}', space=vmem, size = 0x8000, scoped, tag = 'input window, operand 3, single buffered']
    #allocation8 [shape = 'u8[32768]{0}', space=vmem, size = 0x8000, scoped, tag = 'input window, operand 5, single buffered']
    #allocation9 [shape = 's32[1]{0}', space=sflag, size = 0x4, scoped, tag = 'scoped memory for tpu_custom_call.1']
    #allocation10 [shape = 'u8[32768]{0}', space=vmem, size = 0x8000, scoped, tag = 'input window, operand 7, single buffered']
    #allocation11 [shape = 'u8[4096]{0}', space=vmem, size = 0x1000, scoped, tag = 'output window, operand 0, single buffered']
    %14 = vsyncpa [#allocation3], 0
    %15 = vsyncpa [#allocation6], 0
    %16 = vsyncpa [#allocation9], 0
    %17 = vsyncpa [#allocation4], 0
    // Predicated region
    $region2: #{tpu_custom_call.1} parent=1 // pred_check
      _
    $region3: #{tpu_custom_call.1} parent=1 // pred_check_branch
      %19 = sbr.rel (0) target = $region5
    $region4: #{tpu_custom_call.1} parent=1 // pred_region
      %s21 = ssub.s32 64, 64
      %22 = vsyncadd [#allocation3], %s21
      %s24 = sshll.u32 [#allocation2], 4
      %s25 = int_to_ptr.vmem [resolvable:$true] %s24
      %27 = dma.hbm_to_vmem [thread:$0]  %s0, 64, %s25, [#allocation3]
    $region5: #{tpu_custom_call.1} parent=1 // pred_fallthru
      _
    // Predicated region
    $region6: #{tpu_custom_call.1} parent=1 // pred_check
      _
    $region7: #{tpu_custom_call.1} parent=1 // pred_check_branch
      %29 = sbr.rel (0) target = $region9
    $region8: #{tpu_custom_call.1} parent=1 // pred_region
      %s31 = ssub.s32 1024, 1024
      %32 = vsyncadd [#allocation6], %s31
      %s33 = sshll.u32 [#allocation5], 4
      %s34 = int_to_ptr.vmem [resolvable:$true] %s33
      %39 = dma.hbm_to_vmem [thread:$0]  %s1, 1024, %s34, [#allocation6], 64, 64, 4
    $region9: #{tpu_custom_call.1} parent=1 // pred_fallthru
      _
    // Predicated region
    $region10: #{tpu_custom_call.1} parent=1 // pred_check
      _
    $region11: #{tpu_custom_call.1} parent=1 // pred_check_branch
      %41 = sbr.rel (0) target = $region13
    $region12: #{tpu_custom_call.1} parent=1 // pred_region
      _
    $region13: #{tpu_custom_call.1} parent=1 // pred_fallthru
      _
    // Predicated region
    $region14: #{tpu_custom_call.1} parent=1 // pred_check
      _
    $region15: #{tpu_custom_call.1} parent=1 // pred_check_branch
      %43 = sbr.rel (0) target = $region17
    $region16: #{tpu_custom_call.1} parent=1 // pred_region
      %s45 = ssub.s32 1024, 1024
      %46 = vsyncadd [#allocation6], %s45
      %s47 = sshll.u32 [#allocation7], 4
      %s48 = int_to_ptr.vmem [resolvable:$true] %s47
      %53 = dma.hbm_to_vmem [thread:$0]  %s3, 1024, %s48, [#allocation6], 64, 64, 4
    $region17: #{tpu_custom_call.1} parent=1 // pred_fallthru
      _
    // Predicated region
    $region18: #{tpu_custom_call.1} parent=1 // pred_check
      _
    $region19: #{tpu_custom_call.1} parent=1 // pred_check_branch
      %55 = sbr.rel (0) target = $region21
    $region20: #{tpu_custom_call.1} parent=1 // pred_region
      _
    $region21: #{tpu_custom_call.1} parent=1 // pred_fallthru
      _
    // Predicated region
    $region22: #{tpu_custom_call.1} parent=1 // pred_check
      _
    $region23: #{tpu_custom_call.1} parent=1 // pred_check_branch
      %57 = sbr.rel (0) target = $region25
    $region24: #{tpu_custom_call.1} parent=1 // pred_region
      %s59 = ssub.s32 1024, 1024
      %60 = vsyncadd [#allocation9], %s59
      %s61 = sshll.u32 [#allocation8], 4
      %s62 = int_to_ptr.vmem [resolvable:$true] %s61
      %67 = dma.hbm_to_vmem [thread:$0]  %s5, 1024, %s62, [#allocation9], 64, 64, 4
    $region25: #{tpu_custom_call.1} parent=1 // pred_fallthru
      _
    // Predicated region
    $region26: #{tpu_custom_call.1} parent=1 // pred_check
      _
    $region27: #{tpu_custom_call.1} parent=1 // pred_check_branch
      %69 = sbr.rel (0) target = $region29
    $region28: #{tpu_custom_call.1} parent=1 // pred_region
      _
    $region29: #{tpu_custom_call.1} parent=1 // pred_fallthru
      _
    // Predicated region
    $region30: #{tpu_custom_call.1} parent=1 // pred_check
      _
    $region31: #{tpu_custom_call.1} parent=1 // pred_check_branch
      %71 = sbr.rel (0) target = $region33
    $region32: #{tpu_custom_call.1} parent=1 // pred_region
      %s73 = ssub.s32 1024, 1024
      %74 = vsyncadd [#allocation9], %s73
      %s75 = sshll.u32 [#allocation10], 4
      %s76 = int_to_ptr.vmem [resolvable:$true] %s75
      %81 = dma.hbm_to_vmem [thread:$0]  %s7, 1024, %s76, [#allocation9], 64, 64, 4
    $region33: #{tpu_custom_call.1} parent=1 // pred_fallthru
      _
    // Predicated region
    $region34: #{tpu_custom_call.1} parent=1 // pred_check
      _
    $region35: #{tpu_custom_call.1} parent=1 // pred_check_branch
      %83 = sbr.rel (0) target = $region37
    $region36: #{tpu_custom_call.1} parent=1 // pred_region
      _
    $region37: #{tpu_custom_call.1} parent=1 // pred_fallthru
      _
    // Predicated region
    $region38: #{tpu_custom_call.1} parent=1 // pred_check
      _
    $region39: #{tpu_custom_call.1} parent=1 // pred_check_branch
      %85 = sbr.rel (0) target = $region41
    $region40: #{tpu_custom_call.1} parent=1 // pred_region
      %86 = dma.done [#allocation3], 64
    $region41: #{tpu_custom_call.1} parent=1 // pred_fallthru
      _
    // Predicated region
    $region42: #{tpu_custom_call.1} parent=1 // pred_check
      _
    $region43: #{tpu_custom_call.1} parent=1 // pred_check_branch
      %88 = sbr.rel (0) target = $region45
    $region44: #{tpu_custom_call.1} parent=1 // pred_region
      %89 = dma.done [#allocation6], 1024
    $region45: #{tpu_custom_call.1} parent=1 // pred_fallthru
      _
    // Predicated region
    $region46: #{tpu_custom_call.1} parent=1 // pred_check
      _
    $region47: #{tpu_custom_call.1} parent=1 // pred_check_branch
      %91 = sbr.rel (0) target = $region49
    $region48: #{tpu_custom_call.1} parent=1 // pred_region
      %92 = dma.done [#allocation6], 1024
    $region49: #{tpu_custom_call.1} parent=1 // pred_fallthru
      _
    // Predicated region
    $region50: #{tpu_custom_call.1} parent=1 // pred_check
      _
    $region51: #{tpu_custom_call.1} parent=1 // pred_check_branch
      %94 = sbr.rel (0) target = $region53
    $region52: #{tpu_custom_call.1} parent=1 // pred_region
      %95 = dma.done [#allocation9], 1024
    $region53: #{tpu_custom_call.1} parent=1 // pred_fallthru
      _
    // Predicated region
    $region54: #{tpu_custom_call.1} parent=1 // pred_check
      _
    $region55: #{tpu_custom_call.1} parent=1 // pred_check_branch
      %97 = sbr.rel (0) target = $region57
    $region56: #{tpu_custom_call.1} parent=1 // pred_region
      %98 = dma.done [#allocation9], 1024
    $region57: #{tpu_custom_call.1} parent=1 // pred_fallthru
      _
    %v100 = vld [vmem:[#allocation2] sm:$0xf]
    %v101 = vld [vmem:[#allocation5] sm:$0xf]
    %v102 = vld [vmem:[#allocation5 + $0x4] sm:$0xf]
    %v103 = vld [vmem:[#allocation5 + $0x8] sm:$0xf]
    %v104 = vld [vmem:[#allocation5 + $0xc] sm:$0xf]
    %v105 = vld [vmem:[#allocation5 + $0x10] sm:$0xf]
    %v106 = vld [vmem:[#allocation5 + $0x14] sm:$0xf]
    %v107 = vld [vmem:[#allocation5 + $0x18] sm:$0xf]
    %v108 = vld [vmem:[#allocation5 + $0x1c] sm:$0xf]
    %v109 = vld [vmem:[#allocation5 + $0x20] sm:$0xf]
    %v110 = vld [vmem:[#allocation5 + $0x24] sm:$0xf]
    %v111 = vld [vmem:[#allocation5 + $0x28] sm:$0xf]
    %v112 = vld [vmem:[#allocation5 + $0x2c] sm:$0xf]
    %v113 = vld [vmem:[#allocation5 + $0x30] sm:$0xf]
    %v114 = vld [vmem:[#allocation5 + $0x34] sm:$0xf]
    %v115 = vld [vmem:[#allocation5 + $0x38] sm:$0xf]
    %v116 = vld [vmem:[#allocation5 + $0x3c] sm:$0xf]
    %v117 = vld [vmem:[%s2] sm:$0x1]
    %v119 = vlaneseq
    %v120 = vshrl.u32 %v119, 7
    %v121 = vsub.s32 0, %v120
    %v122 = vrot.slane %v117, %v121
    %v140 = vunpack.c.l.b16 %v101
    %v141 = vunpack.c.l.b16 %v102
    %v142 = vunpack.c.l.b16 %v103
    %v143 = vunpack.c.l.b16 %v104
    %v144 = vunpack.c.l.b16 %v105
    %v145 = vunpack.c.l.b16 %v106
    %v146 = vunpack.c.l.b16 %v107
    %v147 = vunpack.c.l.b16 %v108
    %v148 = vunpack.c.l.b16 %v109
    %v149 = vunpack.c.l.b16 %v110
    %v150 = vunpack.c.l.b16 %v111
    %v151 = vunpack.c.l.b16 %v112
    %v152 = vunpack.c.l.b16 %v113
    %v153 = vunpack.c.l.b16 %v114
    %v154 = vunpack.c.l.b16 %v115
    %v155 = vunpack.c.l.b16 %v116
    %v156 = vpack.c.b16 %v141, %v140
    %v157 = vpack.c.b16 %v143, %v142
    %v158 = vpack.c.b16 %v145, %v144
    %v159 = vpack.c.b16 %v147, %v146
    %v160 = vpack.c.b16 %v149, %v148
    %v161 = vpack.c.b16 %v151, %v150
    %v162 = vpack.c.b16 %v153, %v152
    %v163 = vpack.c.b16 %v155, %v154
    %172 = vmatprep.subr.bf16.mxu0 0
    %173 = vmatpush1.bf16.msra.mxu0 %v156
    %174 = vmatprep.subr.bf16.mxu0 0
    %175 = vmatpush1.bf16.msra.mxu0 %v157
    %176 = vmatprep.subr.bf16.mxu0 0
    %177 = vmatpush1.bf16.msra.mxu0 %v158
    %178 = vmatprep.subr.bf16.mxu0 0
    %179 = vmatpush1.bf16.msra.mxu0 %v159
    %180 = vmatprep.subr.bf16.mxu0 0
    %181 = vmatpush1.bf16.msra.mxu0 %v160
    %182 = vmatprep.subr.bf16.mxu0 0
    %183 = vmatpush1.bf16.msra.mxu0 %v161
    %184 = vmatprep.subr.bf16.mxu0 0
    %185 = vmatpush1.bf16.msra.mxu0 %v162
    %186 = vmatprep.subr.bf16.mxu0 0
    %187 = vmatpush1.bf16.msra.mxu0 %v163
    %188 = vmatprep.subr.bf16.mxu0 0
    %189 = vmatpush1.bf16.msra.mxu0 0
    %190 = vmatprep.subr.bf16.mxu0 0
    %191 = vmatpush1.bf16.msra.mxu0 0
    %192 = vmatprep.subr.bf16.mxu0 0
    %193 = vmatpush1.bf16.msra.mxu0 0
    %194 = vmatprep.subr.bf16.mxu0 0
    %195 = vmatpush1.bf16.msra.mxu0 0
    %196 = vmatprep.subr.bf16.mxu0 0
    %197 = vmatpush1.bf16.msra.mxu0 0
    %198 = vmatprep.subr.bf16.mxu0 0
    %199 = vmatpush1.bf16.msra.mxu0 0
    %200 = vmatprep.subr.bf16.mxu0 0
    %201 = vmatpush1.bf16.msra.mxu0 0
    %202 = vmatprep.subr.bf16.mxu0 0
    %203 = vmatpush1.bf16.msra.mxu0 0
    %204 = vmatprep.mubr.bf16.mxu0 0
    %205 = vmatmul.mubr.bf16.gmra.mrb[0].mxu0 %v100
    %v206 = vpop.f32.mrb[0].mxu0
    %v207 = vadd.f32 %v122, %v206
    %v208 = vpop.f32.mrb[0].mxu0
    %v209 = vpop.f32.mrb[0].mxu0
    %v210 = vpop.f32.mrb[0].mxu0
    %211 = vdwg.mxu0
    %v212 = vmax.f32 %v207, 0.0
    %v213 = vpack.c.bf16 %v212, %v212
    %v214 = vld [vmem:[#allocation7] sm:$0xf]
    %v215 = vld [vmem:[#allocation7 + $0x4] sm:$0xf]
    %v216 = vld [vmem:[#allocation7 + $0x8] sm:$0xf]
    %v217 = vld [vmem:[#allocation7 + $0xc] sm:$0xf]
    %v218 = vld [vmem:[#allocation7 + $0x10] sm:$0xf]
    %v219 = vld [vmem:[#allocation7 + $0x14] sm:$0xf]
    %v220 = vld [vmem:[#allocation7 + $0x18] sm:$0xf]
    %v221 = vld [vmem:[#allocation7 + $0x1c] sm:$0xf]
    %v222 = vld [vmem:[#allocation7 + $0x20] sm:$0xf]
    %v223 = vld [vmem:[#allocation7 + $0x24] sm:$0xf]
    %v224 = vld [vmem:[#allocation7 + $0x28] sm:$0xf]
    %v225 = vld [vmem:[#allocation7 + $0x2c] sm:$0xf]
    %v226 = vld [vmem:[#allocation7 + $0x30] sm:$0xf]
    %v227 = vld [vmem:[#allocation7 + $0x34] sm:$0xf]
    %v228 = vld [vmem:[#allocation7 + $0x38] sm:$0xf]
    %v229 = vld [vmem:[#allocation7 + $0x3c] sm:$0xf]
    %v230 = vld [vmem:[%s4] sm:$0x1]
    %v232 = vlaneseq
    %v233 = vshrl.u32 %v232, 7
    %v234 = vsub.s32 0, %v233
    %v235 = vrot.slane %v230, %v234
    %v253 = vunpack.c.l.b16 %v214
    %v254 = vunpack.c.l.b16 %v215
    %v255 = vunpack.c.l.b16 %v216
    %v256 = vunpack.c.l.b16 %v217
    %v257 = vunpack.c.l.b16 %v218
    %v258 = vunpack.c.l.b16 %v219
    %v259 = vunpack.c.l.b16 %v220
    %v260 = vunpack.c.l.b16 %v221
    %v261 = vunpack.c.l.b16 %v222
    %v262 = vunpack.c.l.b16 %v223
    %v263 = vunpack.c.l.b16 %v224
    %v264 = vunpack.c.l.b16 %v225
    %v265 = vunpack.c.l.b16 %v226
    %v266 = vunpack.c.l.b16 %v227
    %v267 = vunpack.c.l.b16 %v228
    %v268 = vunpack.c.l.b16 %v229
    %v269 = vpack.c.b16 %v254, %v253
    %v270 = vpack.c.b16 %v256, %v255
    %v271 = vpack.c.b16 %v258, %v257
    %v272 = vpack.c.b16 %v260, %v259
    %v273 = vpack.c.b16 %v262, %v261
    %v274 = vpack.c.b16 %v264, %v263
    %v275 = vpack.c.b16 %v266, %v265
    %v276 = vpack.c.b16 %v268, %v267
    %285 = vmatprep.subr.bf16.mxu0 0
    %286 = vmatpush1.bf16.msra.mxu0 %v269
    %287 = vmatprep.subr.bf16.mxu0 0
    %288 = vmatpush1.bf16.msra.mxu0 %v270
    %289 = vmatprep.subr.bf16.mxu0 0
    %290 = vmatpush1.bf16.msra.mxu0 %v271
    %291 = vmatprep.subr.bf16.mxu0 0
    %292 = vmatpush1.bf16.msra.mxu0 %v272
    %293 = vmatprep.subr.bf16.mxu0 0
    %294 = vmatpush1.bf16.msra.mxu0 %v273
    %295 = vmatprep.subr.bf16.mxu0 0
    %296 = vmatpush1.bf16.msra.mxu0 %v274
    %297 = vmatprep.subr.bf16.mxu0 0
    %298 = vmatpush1.bf16.msra.mxu0 %v275
    %299 = vmatprep.subr.bf16.mxu0 0
    %300 = vmatpush1.bf16.msra.mxu0 %v276
    %301 = vmatprep.subr.bf16.mxu0 0
    %302 = vmatpush1.bf16.msra.mxu0 0
    %303 = vmatprep.subr.bf16.mxu0 0
    %304 = vmatpush1.bf16.msra.mxu0 0
    %305 = vmatprep.subr.bf16.mxu0 0
    %306 = vmatpush1.bf16.msra.mxu0 0
    %307 = vmatprep.subr.bf16.mxu0 0
    %308 = vmatpush1.bf16.msra.mxu0 0
    %309 = vmatprep.subr.bf16.mxu0 0
    %310 = vmatpush1.bf16.msra.mxu0 0
    %311 = vmatprep.subr.bf16.mxu0 0
    %312 = vmatpush1.bf16.msra.mxu0 0
    %313 = vmatprep.subr.bf16.mxu0 0
    %314 = vmatpush1.bf16.msra.mxu0 0
    %315 = vmatprep.subr.bf16.mxu0 0
    %316 = vmatpush1.bf16.msra.mxu0 0
    %317 = vmatprep.mubr.bf16.mxu0 0
    %318 = vmatmul.mubr.bf16.gmra.mrb[0].mxu0 %v213
    %v319 = vpop.f32.mrb[0].mxu0
    %v320 = vadd.f32 %v235, %v319
    %v321 = vpop.f32.mrb[0].mxu0
    %v322 = vpop.f32.mrb[0].mxu0
    %v323 = vpop.f32.mrb[0].mxu0
    %324 = vdwg.mxu0
    %v325 = vmax.f32 %v320, 0.0
    %v326 = vpack.c.bf16 %v325, %v325
    %v327 = vld [vmem:[#allocation8] sm:$0xf]
    %v328 = vld [vmem:[#allocation8 + $0x4] sm:$0xf]
    %v329 = vld [vmem:[#allocation8 + $0x8] sm:$0xf]
    %v330 = vld [vmem:[#allocation8 + $0xc] sm:$0xf]
    %v331 = vld [vmem:[#allocation8 + $0x10] sm:$0xf]
    %v332 = vld [vmem:[#allocation8 + $0x14] sm:$0xf]
    %v333 = vld [vmem:[#allocation8 + $0x18] sm:$0xf]
    %v334 = vld [vmem:[#allocation8 + $0x1c] sm:$0xf]
    %v335 = vld [vmem:[#allocation8 + $0x20] sm:$0xf]
    %v336 = vld [vmem:[#allocation8 + $0x24] sm:$0xf]
    %v337 = vld [vmem:[#allocation8 + $0x28] sm:$0xf]
    %v338 = vld [vmem:[#allocation8 + $0x2c] sm:$0xf]
    %v339 = vld [vmem:[#allocation8 + $0x30] sm:$0xf]
    %v340 = vld [vmem:[#allocation8 + $0x34] sm:$0xf]
    %v341 = vld [vmem:[#allocation8 + $0x38] sm:$0xf]
    %v342 = vld [vmem:[#allocation8 + $0x3c] sm:$0xf]
    %v343 = vld [vmem:[%s6] sm:$0x1]
    %v345 = vlaneseq
    %v346 = vshrl.u32 %v345, 7
    %v347 = vsub.s32 0, %v346
    %v348 = vrot.slane %v343, %v347
    %v366 = vunpack.c.l.b16 %v327
    %v367 = vunpack.c.l.b16 %v328
    %v368 = vunpack.c.l.b16 %v329
    %v369 = vunpack.c.l.b16 %v330
    %v370 = vunpack.c.l.b16 %v331
    %v371 = vunpack.c.l.b16 %v332
    %v372 = vunpack.c.l.b16 %v333
    %v373 = vunpack.c.l.b16 %v334
    %v374 = vunpack.c.l.b16 %v335
    %v375 = vunpack.c.l.b16 %v336
    %v376 = vunpack.c.l.b16 %v337
    %v377 = vunpack.c.l.b16 %v338
    %v378 = vunpack.c.l.b16 %v339
    %v379 = vunpack.c.l.b16 %v340
    %v380 = vunpack.c.l.b16 %v341
    %v381 = vunpack.c.l.b16 %v342
    %v382 = vpack.c.b16 %v367, %v366
    %v383 = vpack.c.b16 %v369, %v368
    %v384 = vpack.c.b16 %v371, %v370
    %v385 = vpack.c.b16 %v373, %v372
    %v386 = vpack.c.b16 %v375, %v374
    %v387 = vpack.c.b16 %v377, %v376
    %v388 = vpack.c.b16 %v379, %v378
    %v389 = vpack.c.b16 %v381, %v380
    %398 = vmatprep.subr.bf16.mxu0 0
    %399 = vmatpush1.bf16.msra.mxu0 %v382
    %400 = vmatprep.subr.bf16.mxu0 0
    %401 = vmatpush1.bf16.msra.mxu0 %v383
    %402 = vmatprep.subr.bf16.mxu0 0
    %403 = vmatpush1.bf16.msra.mxu0 %v384
    %404 = vmatprep.subr.bf16.mxu0 0
    %405 = vmatpush1.bf16.msra.mxu0 %v385
    %406 = vmatprep.subr.bf16.mxu0 0
    %407 = vmatpush1.bf16.msra.mxu0 %v386
    %408 = vmatprep.subr.bf16.mxu0 0
    %409 = vmatpush1.bf16.msra.mxu0 %v387
    %410 = vmatprep.subr.bf16.mxu0 0
    %411 = vmatpush1.bf16.msra.mxu0 %v388
    %412 = vmatprep.subr.bf16.mxu0 0
    %413 = vmatpush1.bf16.msra.mxu0 %v389
    %414 = vmatprep.subr.bf16.mxu0 0
    %415 = vmatpush1.bf16.msra.mxu0 0
    %416 = vmatprep.subr.bf16.mxu0 0
    %417 = vmatpush1.bf16.msra.mxu0 0
    %418 = vmatprep.subr.bf16.mxu0 0
    %419 = vmatpush1.bf16.msra.mxu0 0
    %420 = vmatprep.subr.bf16.mxu0 0
    %421 = vmatpush1.bf16.msra.mxu0 0
    %422 = vmatprep.subr.bf16.mxu0 0
    %423 = vmatpush1.bf16.msra.mxu0 0
    %424 = vmatprep.subr.bf16.mxu0 0
    %425 = vmatpush1.bf16.msra.mxu0 0
    %426 = vmatprep.subr.bf16.mxu0 0
    %427 = vmatpush1.bf16.msra.mxu0 0
    %428 = vmatprep.subr.bf16.mxu0 0
    %429 = vmatpush1.bf16.msra.mxu0 0
    %430 = vmatprep.mubr.bf16.mxu0 0
    %431 = vmatmul.mubr.bf16.gmra.mrb[0].mxu0 %v326
    %v432 = vpop.f32.mrb[0].mxu0
    %v433 = vadd.f32 %v348, %v432
    %v434 = vpop.f32.mrb[0].mxu0
    %v435 = vpop.f32.mrb[0].mxu0
    %v436 = vpop.f32.mrb[0].mxu0
    %437 = vdwg.mxu0
    %v438 = vmax.f32 %v433, 0.0
    %v439 = vpack.c.bf16 %v438, %v438
    %v440 = vld [vmem:[#allocation10] sm:$0xf]
    %v441 = vld [vmem:[#allocation10 + $0x4] sm:$0xf]
    %v442 = vld [vmem:[#allocation10 + $0x8] sm:$0xf]
    %v443 = vld [vmem:[#allocation10 + $0xc] sm:$0xf]
    %v444 = vld [vmem:[#allocation10 + $0x10] sm:$0xf]
    %v445 = vld [vmem:[#allocation10 + $0x14] sm:$0xf]
    %v446 = vld [vmem:[#allocation10 + $0x18] sm:$0xf]
    %v447 = vld [vmem:[#allocation10 + $0x1c] sm:$0xf]
    %v448 = vld [vmem:[#allocation10 + $0x20] sm:$0xf]
    %v449 = vld [vmem:[#allocation10 + $0x24] sm:$0xf]
    %v450 = vld [vmem:[#allocation10 + $0x28] sm:$0xf]
    %v451 = vld [vmem:[#allocation10 + $0x2c] sm:$0xf]
    %v452 = vld [vmem:[#allocation10 + $0x30] sm:$0xf]
    %v453 = vld [vmem:[#allocation10 + $0x34] sm:$0xf]
    %v454 = vld [vmem:[#allocation10 + $0x38] sm:$0xf]
    %v455 = vld [vmem:[#allocation10 + $0x3c] sm:$0xf]
    %v456 = vld [vmem:[%s8] sm:$0x1]
    %v458 = vlaneseq
    %v459 = vshrl.u32 %v458, 7
    %v460 = vsub.s32 0, %v459
    %v461 = vrot.slane %v456, %v460
    %v479 = vunpack.c.l.b16 %v440
    %v480 = vunpack.c.l.b16 %v441
    %v481 = vunpack.c.l.b16 %v442
    %v482 = vunpack.c.l.b16 %v443
    %v483 = vunpack.c.l.b16 %v444
    %v484 = vunpack.c.l.b16 %v445
    %v485 = vunpack.c.l.b16 %v446
    %v486 = vunpack.c.l.b16 %v447
    %v487 = vunpack.c.l.b16 %v448
    %v488 = vunpack.c.l.b16 %v449
    %v489 = vunpack.c.l.b16 %v450
    %v490 = vunpack.c.l.b16 %v451
    %v491 = vunpack.c.l.b16 %v452
    %v492 = vunpack.c.l.b16 %v453
    %v493 = vunpack.c.l.b16 %v454
    %v494 = vunpack.c.l.b16 %v455
    %v495 = vpack.c.b16 %v480, %v479
    %v496 = vpack.c.b16 %v482, %v481
    %v497 = vpack.c.b16 %v484, %v483
    %v498 = vpack.c.b16 %v486, %v485
    %v499 = vpack.c.b16 %v488, %v487
    %v500 = vpack.c.b16 %v490, %v489
    %v501 = vpack.c.b16 %v492, %v491
    %v502 = vpack.c.b16 %v494, %v493
    %511 = vmatprep.subr.bf16.mxu0 0
    %512 = vmatpush1.bf16.msra.mxu0 %v495
    %513 = vmatprep.subr.bf16.mxu0 0
    %514 = vmatpush1.bf16.msra.mxu0 %v496
    %515 = vmatprep.subr.bf16.mxu0 0
    %516 = vmatpush1.bf16.msra.mxu0 %v497
    %517 = vmatprep.subr.bf16.mxu0 0
    %518 = vmatpush1.bf16.msra.mxu0 %v498
    %519 = vmatprep.subr.bf16.mxu0 0
    %520 = vmatpush1.bf16.msra.mxu0 %v499
    %521 = vmatprep.subr.bf16.mxu0 0
    %522 = vmatpush1.bf16.msra.mxu0 %v500
    %523 = vmatprep.subr.bf16.mxu0 0
    %524 = vmatpush1.bf16.msra.mxu0 %v501
    %525 = vmatprep.subr.bf16.mxu0 0
    %526 = vmatpush1.bf16.msra.mxu0 %v502
    %527 = vmatprep.subr.bf16.mxu0 0
    %528 = vmatpush1.bf16.msra.mxu0 0
    %529 = vmatprep.subr.bf16.mxu0 0
    %530 = vmatpush1.bf16.msra.mxu0 0
    %531 = vmatprep.subr.bf16.mxu0 0
    %532 = vmatpush1.bf16.msra.mxu0 0
    %533 = vmatprep.subr.bf16.mxu0 0
    %534 = vmatpush1.bf16.msra.mxu0 0
    %535 = vmatprep.subr.bf16.mxu0 0
    %536 = vmatpush1.bf16.msra.mxu0 0
    %537 = vmatprep.subr.bf16.mxu0 0
    %538 = vmatpush1.bf16.msra.mxu0 0
    %539 = vmatprep.subr.bf16.mxu0 0
    %540 = vmatpush1.bf16.msra.mxu0 0
    %541 = vmatprep.subr.bf16.mxu0 0
    %542 = vmatpush1.bf16.msra.mxu0 0
    %543 = vmatprep.mubr.bf16.mxu0 0
    %544 = vmatmul.mubr.bf16.gmra.mrb[0].mxu0 %v439
    %v545 = vpop.f32.mrb[0].mxu0
    %v546 = vadd.f32 %v461, %v545
    %v547 = vpop.f32.mrb[0].mxu0
    %v548 = vpop.f32.mrb[0].mxu0
    %v549 = vpop.f32.mrb[0].mxu0
    %550 = vdwg.mxu0
    %551 = vst [vmem:[#allocation11] sm:$0xff] %v546
    // Predicated region
    $region58: #{tpu_custom_call.1} parent=1 // pred_check
      _
    $region59: #{tpu_custom_call.1} parent=1 // pred_check_branch
      %553 = sbr.rel (0) target = $region61
    $region60: #{tpu_custom_call.1} parent=1 // pred_region
      %s555 = ssub.s32 128, 128
      %556 = vsyncadd [#allocation4], %s555
      %s558 = sshll.u32 [#allocation11], 4
      %s559 = int_to_ptr.vmem [resolvable:$true] %s558
      %561 = dma.vmem_to_hbm [thread:$0]  %s559, 128, %s9, [#allocation4]
    $region61: #{tpu_custom_call.1} parent=1 // pred_fallthru
      _
    // Predicated region
    $region62: #{tpu_custom_call.1} parent=1 // pred_check
      _
    $region63: #{tpu_custom_call.1} parent=1 // pred_check_branch
      %563 = sbr.rel (0) target = $region65
    $region64: #{tpu_custom_call.1} parent=1 // pred_region
      %564 = dma.done [#allocation4], 128
    $region65: #{tpu_custom_call.1} parent=1 // pred_fallthru
      _
    %565 = vsyncpa [#allocation3], 1
    %566 = vsyncpa [#allocation6], 1
    %567 = vsyncpa [#allocation9], 1
    %568 = vsyncpa [#allocation4], 1

</llo_original>
